<compile_context>
chip_gen: v5e
topology: v5e:2x2
jax: 0.10.0
libtpu: 0.0.40
codegen_flags: <defaults>
</compile_context>

<pallas_src>
import functools
import math

import jax
import jax.numpy as jnp
from jax import lax
from jax.experimental import pallas as pl
from jax.experimental.pallas import tpu as pltpu

_BIG_NORM = 1e30  # squared-norm sentinel for padded rows -> exp(l2*scale) == 0


def _round_up(x, m):
    return ((x + m - 1) // m) * m


def _lcm(a, b):
    return a * b // math.gcd(a, b)


def _fold_to_vreg(x, tr, tc):
    """Sum all (8,128)-aligned blocks of a (tr,tc) tile into one (8,128) slab.

    Pure VPU adds on statically aligned views; no cross-lane/sublane (XLU)
    reduction in the inner loop.
    """
    part = x[0:8, :]
    for a in range(1, tr // 8):
        part = part + x[a * 8:(a + 1) * 8, :]
    out = part[:, 0:128]
    for b in range(1, tc // 128):
        out = out + part[:, b * 128:(b + 1) * 128]
    return out


def _mmd_tile_kernel(scales_ref, rows_ref, cols_ref, rsq_ref, csq_ref, out_ref, *,
                     batch, tr, tc, kernel_mul, kernel_num, quadrant_aligned):
    """One (tr, tc) tile of the (n_pad x n_pad) Gaussian-kernel-mixture matrix.

    scales_ref : SMEM (kernel_num,) f32, scales[k] = -1/(bandwidth * kernel_mul**k)
    rows_ref   : VMEM (tr, dp) row block of padded total = concat([source, target])
    cols_ref   : VMEM (tc, dp) col block of padded total
    rsq_ref    : VMEM (tr, 1)  hoisted squared row norms (padded rows -> _BIG_NORM)
    csq_ref    : VMEM (1, tc)  hoisted squared col norms (padded cols -> _BIG_NORM)
    out_ref    : VMEM (8, 128) per-row-tile signed partial sum (vreg accumulator)
    """
    i = pl.program_id(0)          # row-tile index ("parallel")
    j = pl.program_id(1)          # col-tile index ("arbitrary", reduction)

    @pl.when(j == 0)
    def _():
        out_ref[...] = jnp.zeros_like(out_ref)

    # Pairwise squared distances: a single MXU matmul per tile; the norms were
    # hoisted to the wrapper and arrive as tiny per-row/per-col side inputs.
    gram = lax.dot_general(rows_ref[...], cols_ref[...], (((1,), (1,)), ((), ())),
                           preferred_element_type=jnp.float32)             # (tr, tc)
    l2 = jnp.maximum(rsq_ref[...] + csq_ref[...] - 2.0 * gram, 0.0)        # (tr, tc)

    # Mixture of kernel_num Gaussians. For kernel_mul == 2 only the widest
    # bandwidth needs an exp; the rest come from repeated squaring (VPU-only).
    if kernel_mul == 2.0:
        e = jnp.exp(l2 * scales_ref[kernel_num - 1])
        ksum = e
        for _ in range(kernel_num - 1):
            e = e * e
            ksum = ksum + e
    else:
        ksum = jnp.exp(l2 * scales_ref[0])
        for k in range(1, kernel_num):
            ksum = ksum + jnp.exp(l2 * scales_ref[k])

    # Signed contribution: +1 same quadrant (XX / YY), -1 cross quadrant (XY / YX).
    # Padded rows/cols carry huge norms so their kernel values are exactly 0 and
    # need no extra validity mask.
    if quadrant_aligned:
        sign = jnp.where((i * tr < batch) == (j * tc < batch), 1.0, -1.0)
        folded = _fold_to_vreg(ksum, tr, tc) * sign
    else:
        r = lax.broadcasted_iota(jnp.int32, (tr, tc), 0) + i * tr
        c = lax.broadcasted_iota(jnp.int32, (tr, tc), 1) + j * tc
        sign_mat = jnp.where((r < batch) == (c < batch), 1.0, -1.0)
        folded = _fold_to_vreg(sign_mat * ksum, tr, tc)

    # Accumulate in the resident (8,128) output block: full-vreg VPU adds only;
    # no per-step XLU reduction, no masked (1,1) store.
    out_ref[...] = out_ref[...] + folded


def _vmem_estimate(tr, tc, dp, itemsize):
    return (2 * (tr + tc) * dp * itemsize      # double-buffered operand blocks
            + 6 * tr * tc * 4                  # tile-sized f32 intermediates
            + 2 * (tr * 128 + 8 * tc) * 4      # norm side inputs
            + 2 * 8 * 128 * 4                  # output block
            + (2 << 20))                       # headroom / internal scratch


def _auto_tiles(n, dp, itemsize, vmem_budget, row_cap, col_cap):
    """Lane-dense power-of-two tiles, independent of batch divisibility."""
    tc = 128
    while tc * 2 <= col_cap and tc * 2 <= _round_up(n, 128):
        tc *= 2
    tr = 8
    while tr * 2 <= row_cap and tr * 2 <= _round_up(n, 8):
        tr *= 2

    # Shrink tiles if the working set would blow the per-generation VMEM budget
    # (large feature dim).  TODO(synk): block the feature dim instead for huge D.
    while _vmem_estimate(tr, tc, dp, itemsize) > vmem_budget:
        if tr > tc and tr > 8:
            tr //= 2
        elif tc > 128:
            tc //= 2
        elif tr > 8:
            tr //= 2
        else:
            break

    # Keep >= 2 row tiles so the "parallel" axis can feed both v7x TensorCores
    # (harmless extra grid steps on single-TC v5e / v6e).
    while tr > 8 and _round_up(n, _lcm(tr, tc)) // tr < 2:
        tr //= 2
    return tr, tc, _vmem_estimate(tr, tc, dp, itemsize)


def mmd_loss_rbf(source, target, *, kernel_mul=2.0, kernel_num=5,
                 row_tile=None, col_tile=None, gram_in_bf16=False):
    """MMD loss with an RBF kernel mixture (fix_sigma=None); matches MMDLoss.forward."""
    assert source.shape == target.shape and source.ndim == 2
    batch, d = source.shape
    n = 2 * batch

    # ---- wrapper-side prologue: everything here is O(N*D) -------------------
    total = jnp.concatenate([source, target], axis=0)               # (n, d)
    t32 = total.astype(jnp.float32)
    sq = jnp.sum(t32 * t32, axis=1)                                 # hoisted row norms
    # Analytic sum of all pairwise squared distances (no n^2 matrix needed).
    col_sums = jnp.sum(t32, axis=0)
    sum_l2 = 2.0 * n * jnp.sum(sq) - 2.0 * jnp.dot(col_sums, col_sums)
    bandwidth = sum_l2 / float(n * n - n)
    bandwidth = bandwidth / (kernel_mul ** (kernel_num // 2))
    mults = jnp.asarray([kernel_mul ** k for k in range(kernel_num)], jnp.float32)
    scales = (-1.0 / (bandwidth * mults)).astype(jnp.float32)       # (kernel_num,)

    # ---- generation-aware tiling & VMEM budget ------------------------------
    try:
        vmem_cap = int(getattr(pltpu.get_tpu_info(), "vmem_capacity_bytes",
                               64 * 1024 * 1024))
    except Exception:
        vmem_cap = 64 * 1024 * 1024                                 # conservative (v7x)
    vmem_budget = int(0.75 * vmem_cap)          # ~48 MiB on v7x, ~96 MiB on v5e/v6e
    tile_cap = 512 if vmem_cap >= 96 * 1024 * 1024 else 256

    dp = _round_up(d, 128)                                          # pad features to lanes
    op_dtype = (jnp.bfloat16 if (gram_in_bf16 and total.dtype == jnp.float32)
                else total.dtype)
    itemsize = jnp.dtype(op_dtype).itemsize

    if row_tile is not None or col_tile is not None:
        tr = int(row_tile) if row_tile is not None else 128
        tc = int(col_tile) if col_tile is not None else 128
        assert tr % 8 == 0 and tc % 128 == 0
        vmem_est = _vmem_estimate(tr, tc, dp, itemsize)
    else:
        tr, tc, vmem_est = _auto_tiles(n, dp, itemsize, vmem_budget, tile_cap, tile_cap)
    vmem_limit = int(min(max(vmem_est, 16 * 1024 * 1024), vmem_budget))

    n_pad = _round_up(n, _lcm(tr, tc))
    grid = (n_pad // tr, n_pad // tc)
    quadrant_aligned = (batch % tr == 0) and (batch % tc == 0)

    # Padded rows get zero features and a huge squared norm, so every kernel
    # value that touches them is exactly exp(-huge) == 0 and drops out.
    total_p = jnp.pad(total, ((0, n_pad - n), (0, dp - d))).astype(op_dtype)
    sq_pad = jnp.concatenate(
        [sq, jnp.full((n_pad - n,), _BIG_NORM, jnp.float32)]).astype(jnp.float32)
    rsq = sq_pad.reshape(n_pad, 1)
    csq = sq_pad.reshape(1, n_pad)

    kernel = functools.partial(
        _mmd_tile_kernel,
        batch=batch, tr=tr, tc=tc,
        kernel_mul=float(kernel_mul), kernel_num=int(kernel_num),
        quadrant_aligned=quadrant_aligned,
    )

    out = pl.pallas_call(
        kernel,
        out_shape=jax.ShapeDtypeStruct((grid[0] * 8, 128), jnp.float32),
        grid_spec=pltpu.PrefetchScalarGridSpec(
            num_scalar_prefetch=0,
            grid=grid,
            in_specs=[
                pl.BlockSpec(memory_space=pltpu.MemorySpace.SMEM),    # scales
                pl.BlockSpec((tr, dp), lambda i, j: (i, 0)),          # row block
                pl.BlockSpec((tc, dp), lambda i, j: (j, 0)),          # col block
                pl.BlockSpec((tr, 1), lambda i, j: (i, 0)),           # row sq-norms
                pl.BlockSpec((1, tc), lambda i, j: (0, j)),           # col sq-norms
            ],
            out_specs=pl.BlockSpec((8, 128), lambda i, j: (i, 0)),
        ),
        compiler_params=pltpu.CompilerParams(
            dimension_semantics=("parallel", "arbitrary"),
            vmem_limit_bytes=vmem_limit,
        ),
    )(scales, total_p, total_p, rsq, csq)

    # Each row tile left its signed partial spread over its own (8,128) block.
    return jnp.sum(out) / float(batch * batch)


def _mmd_loss_ref(source, target, kernel_mul=2.0, kernel_num=5):
    """Pure-JAX reference mirroring the PyTorch implementation."""
    batch = source.shape[0]
    total = jnp.concatenate([source, target], axis=0).astype(jnp.float32)
    n = total.shape[0]
    diff = total[None, :, :] - total[:, None, :]
    l2 = jnp.sum(diff * diff, axis=2)
    bandwidth = jnp.sum(l2) / (n * n - n)
    bandwidth = bandwidth / (kernel_mul ** (kernel_num // 2))
    kernels = sum(jnp.exp(-l2 / (bandwidth * kernel_mul ** i)) for i in range(kernel_num))
    xx = jnp.mean(kernels[:batch, :batch])
    yy = jnp.mean(kernels[batch:, batch:])
    xy = jnp.mean(kernels[:batch, batch:])
    yx = jnp.mean(kernels[batch:, :batch])
    return xx + yy - xy - yx


if __name__ == "__main__":
    key = jax.random.PRNGKey(0)
    k_src, k_tgt = jax.random.split(key)

    # 1) Small case (batch % 8 == 0); boundary tiles use the iota sign mask.
    batch, feat = 8, 32
    source = jax.random.normal(k_src, (batch, feat), dtype=jnp.float32)
    target = jax.random.normal(k_tgt, (batch, feat), dtype=jnp.float32) + 0.5
    loss = mmd_loss_rbf(source, target)
    jax.block_until_ready(loss)
    ref = _mmd_loss_ref(source, target)
    assert jnp.allclose(loss, ref, rtol=2e-4, atol=2e-5), (loss, ref)

    # 2) batch % 8 != 0 -> exercises row/col padding + per-element sign mask
    #    on the tiled path (no monolithic fallback anymore).
    b2 = 12
    src2 = jax.random.normal(jax.random.PRNGKey(1), (b2, feat), dtype=jnp.float32)
    tgt2 = jax.random.normal(jax.random.PRNGKey(2), (b2, feat), dtype=jnp.float32) + 0.25
    loss2 = mmd_loss_rbf(src2, tgt2)
    jax.block_until_ready(loss2)
    ref2 = _mmd_loss_ref(src2, tgt2)
    assert jnp.allclose(loss2, ref2, rtol=2e-4, atol=2e-5), (loss2, ref2)

    # 3) Quadrant-aligned scalar-sign path with a multi-tile (4 x 2) grid.
    b3, f3 = 128, 64
    src3 = jax.random.normal(jax.random.PRNGKey(3), (b3, f3), dtype=jnp.float32)
    tgt3 = jax.random.normal(jax.random.PRNGKey(4), (b3, f3), dtype=jnp.float32) + 0.25
    loss3 = mmd_loss_rbf(src3, tgt3, row_tile=64, col_tile=128)
    jax.block_until_ready(loss3)
    ref3 = _mmd_loss_ref(src3, tgt3)
    assert jnp.allclose(loss3, ref3, rtol=5e-4, atol=1e-5), (loss3, ref3)

    print("KERNEL_OK")
</pallas_src>

<mosaic_0001>
module attributes {stable_mosaic.version = 11 : i64} {
  func.func @_mmd_tile_kernel(%arg0: i32, %arg1: i32, %arg2: memref<5xf32, #tpu.memory_space<smem>>, %arg3: memref<16x128xf32, #tpu.memory_space<vmem>>, %arg4: memref<128x128xf32, #tpu.memory_space<vmem>>, %arg5: memref<16x1xf32, #tpu.memory_space<vmem>>, %arg6: memref<1x128xf32, #tpu.memory_space<vmem>>, %arg7: memref<8x128xf32, #tpu.memory_space<vmem>>) attributes {dimension_semantics = [#tpu.dimension_semantics<parallel>, #tpu.dimension_semantics<arbitrary>], iteration_bounds = array<i64: 8, 1>, scalar_prefetch = 0 : i64, scratch_operands = 0 : i64, tpu.core_type = #tpu.core_type<tc>, window_params = [{transform_indices = @transform_0, window_bounds = array<i64: 5>}, {transform_indices = @transform_1, window_bounds = array<i64: 16, 128>}, {transform_indices = @transform_2, window_bounds = array<i64: 128, 128>}, {transform_indices = @transform_3, window_bounds = array<i64: 16, 1>}, {transform_indices = @transform_4, window_bounds = array<i64: 1, 128>}, {transform_indices = @transform_5, window_bounds = array<i64: 8, 128>}]} {
    %c0_i32 = arith.constant 0 : i32
    %0 = arith.cmpi eq, %arg1, %c0_i32 : i32
    %1 = arith.extui %0 : i1 to i32
    %c0_i32_0 = arith.constant 0 : i32
    %2 = arith.cmpi ne, %1, %c0_i32_0 : i32
    scf.if %2 {
      %cst_18 = arith.constant 0.000000e+00 : f32
      %52 = vector.broadcast %cst_18 : f32 to vector<8x128xf32>
      %c0_19 = arith.constant 0 : index
      %c0_20 = arith.constant 0 : index
      %53 = vector.load %arg7[%c0_19, %c0_20] : memref<8x128xf32, #tpu.memory_space<vmem>>, vector<8x128xf32>
      tpu.vector_store %arg7[%c0_19, %c0_20], %52 {strides = array<i32>} : memref<8x128xf32, #tpu.memory_space<vmem>>, vector<8x128xf32>,
    } else {
    }
    %c0 = arith.constant 0 : index
    %c0_1 = arith.constant 0 : index
    %3 = vector.load %arg3[%c0, %c0_1] : memref<16x128xf32, #tpu.memory_space<vmem>>, vector<16x128xf32>
    %c0_2 = arith.constant 0 : index
    %c0_3 = arith.constant 0 : index
    %4 = vector.load %arg4[%c0_2, %c0_3] : memref<128x128xf32, #tpu.memory_space<vmem>>, vector<128x128xf32>
    %cst = arith.constant dense<0.000000e+00> : vector<16x128xf32>
    %5 = tpu.matmul %3, %4, %cst {dimension_numbers = #tpu.dot_dimension_numbers<[1], [1], [0], [0], [0, 0, 1, 0], [], []>} : vector<16x128xf32>, vector<128x128xf32>, vector<16x128xf32> -> vector<16x128xf32>
    %c0_4 = arith.constant 0 : index
    %c0_5 = arith.constant 0 : index
    %6 = vector.load %arg5[%c0_4, %c0_5] : memref<16x1xf32, #tpu.memory_space<vmem>>, vector<16x1xf32>
    %c0_6 = arith.constant 0 : index
    %c0_7 = arith.constant 0 : index
    %7 = vector.load %arg6[%c0_6, %c0_7] : memref<1x128xf32, #tpu.memory_space<vmem>>, vector<1x128xf32>
    %8 = vector.broadcast %6 : vector<16x1xf32> to vector<16x128xf32>
    %9 = vector.broadcast %7 : vector<1x128xf32> to vector<16x128xf32>
    %10 = arith.addf %8, %9 : vector<16x128xf32>
    %cst_8 = arith.constant 2.000000e+00 : f32
    %11 = vector.broadcast %cst_8 : f32 to vector<16x128xf32>
    %12 = arith.mulf %11, %5 : vector<16x128xf32>
    %13 = arith.subf %10, %12 : vector<16x128xf32>
    %cst_9 = arith.constant 0.000000e+00 : f32
    %14 = vector.broadcast %cst_9 : f32 to vector<16x128xf32>
    %15 = arith.maximumf %13, %14 : vector<16x128xf32>
    %c4 = arith.constant 4 : index
    %16 = memref.load %arg2[%c4] : memref<5xf32, #tpu.memory_space<smem>>
    %17 = vector.broadcast %16 : f32 to vector<16x128xf32>
    %18 = arith.mulf %15, %17 : vector<16x128xf32>
    %19 = math.exp %18 : vector<16x128xf32>
    %20 = arith.mulf %19, %19 : vector<16x128xf32>
    %21 = arith.addf %19, %20 : vector<16x128xf32>
    %22 = arith.mulf %20, %20 : vector<16x128xf32>
    %23 = arith.addf %21, %22 : vector<16x128xf32>
    %24 = arith.mulf %22, %22 : vector<16x128xf32>
    %25 = arith.addf %23, %24 : vector<16x128xf32>
    %26 = arith.mulf %24, %24 : vector<16x128xf32>
    %27 = arith.addf %25, %26 : vector<16x128xf32>
    %28 = tpu.iota {dimensions = array<i32: 0>} : vector<16x128xi32>
    %c16_i32 = arith.constant 16 : i32
    %29 = arith.muli %arg0, %c16_i32 : i32
    %30 = vector.broadcast %29 : i32 to vector<16x128xi32>
    %31 = arith.addi %28, %30 : vector<16x128xi32>
    %32 = tpu.iota {dimensions = array<i32: 1>} : vector<16x128xi32>
    %c128_i32 = arith.constant 128 : i32
    %33 = arith.muli %arg1, %c128_i32 : i32
    %34 = vector.broadcast %33 : i32 to vector<16x128xi32>
    %35 = arith.addi %32, %34 : vector<16x128xi32>
    %c8_i32 = arith.constant 8 : i32
    %36 = vector.broadcast %c8_i32 : i32 to vector<16x128xi32>
    %37 = arith.cmpi slt, %31, %36 : vector<16x128xi32>
    %c8_i32_10 = arith.constant 8 : i32
    %38 = vector.broadcast %c8_i32_10 : i32 to vector<16x128xi32>
    %39 = arith.cmpi slt, %35, %38 : vector<16x128xi32>
    %40 = arith.xori %37, %39 : vector<16x128xi1>
    %cst_11 = arith.constant dense<true> : vector<16x128xi1>
    %41 = arith.xori %40, %cst_11 : vector<16x128xi1>
    %cst_12 = arith.constant 1.000000e+00 : f32
    %cst_13 = arith.constant -1.000000e+00 : f32
    %42 = vector.broadcast %cst_12 : f32 to vector<16x128xf32>
    %43 = vector.broadcast %cst_13 : f32 to vector<16x128xf32>
    %44 = arith.select %41, %42, %43 : vector<16x128xi1>, vector<16x128xf32>
    %45 = arith.mulf %44, %27 : vector<16x128xf32>
    %46 = vector.extract_strided_slice %45 {offsets = [0, 0], sizes = [8, 128], strides = [1, 1]} : vector<16x128xf32> to vector<8x128xf32>
    %47 = vector.extract_strided_slice %45 {offsets = [8, 0], sizes = [8, 128], strides = [1, 1]} : vector<16x128xf32> to vector<8x128xf32>
    %48 = arith.addf %46, %47 : vector<8x128xf32>
    %c0_14 = arith.constant 0 : index
    %c0_15 = arith.constant 0 : index
    %49 = vector.load %arg7[%c0_14, %c0_15] : memref<8x128xf32, #tpu.memory_space<vmem>>, vector<8x128xf32>
    %50 = arith.addf %49, %48 : vector<8x128xf32>
    %c0_16 = arith.constant 0 : index
    %c0_17 = arith.constant 0 : index
    %51 = vector.load %arg7[%c0_16, %c0_17] : memref<8x128xf32, #tpu.memory_space<vmem>>, vector<8x128xf32>
    tpu.vector_store %arg7[%c0_16, %c0_17], %50 {strides = array<i32>} : memref<8x128xf32, #tpu.memory_space<vmem>>, vector<8x128xf32>,
    return
  }
  func.func @transform_0(%arg0: i32, %arg1: i32) -> i32 {
    %c0_i32 = arith.constant 0 : i32
    %c0_i32_0 = arith.constant 0 : i32
    return %c0_i32 : i32
  }
  func.func @transform_1(%arg0: i32, %arg1: i32) -> (i32, i32) {
    %c0_i32 = arith.constant 0 : i32
    %c0_i32_0 = arith.constant 0 : i32
    return %arg0, %c0_i32 : i32, i32
  }
  func.func @transform_2(%arg0: i32, %arg1: i32) -> (i32, i32) {
    %c0_i32 = arith.constant 0 : i32
    %c0_i32_0 = arith.constant 0 : i32
    return %arg1, %c0_i32 : i32, i32
  }
  func.func @transform_3(%arg0: i32, %arg1: i32) -> (i32, i32) {
    %c0_i32 = arith.constant 0 : i32
    %c0_i32_0 = arith.constant 0 : i32
    return %arg0, %c0_i32 : i32, i32
  }
  func.func @transform_4(%arg0: i32, %arg1: i32) -> (i32, i32) {
    %c0_i32 = arith.constant 0 : i32
    %c0_i32_0 = arith.constant 0 : i32
    return %c0_i32, %arg1 : i32, i32
  }
  func.func @transform_5(%arg0: i32, %arg1: i32) -> (i32, i32) {
    %c0_i32 = arith.constant 0 : i32
    %c0_i32_0 = arith.constant 0 : i32
    return %arg0, %c0_i32 : i32, i32
  }
}

</mosaic_0001>

<llo_original>
// kernel: tpu_custom_call.1
$region0: #{tpu_custom_call.1}
  #allocation0 [shape = 'u32[]', space=smem, size = 0x4, offset = 0x4, fixed_abs, tag = 'smem constant byte address 0x4 - core index']
  #allocation1 [shape = 'u32[72,128]{1,0:T(1,128)}', space=vmem, size = 0x9000, scoped, tag = 'internal scratch']
  %s0 = inlined_call_operand.vmem [shape: f32[5], index: 0, kind: input, shape index: {}]
  %s1 = inlined_call_operand.vmem [shape: f32[128,128], index: 1, kind: input, shape index: {}]
  %s2 = inlined_call_operand.hbm [shape: f32[128,128], index: 2, kind: input, shape index: {}]
  %s3 = inlined_call_operand.vmem [shape: f32[128,1], index: 3, kind: input, shape index: {}]
  %s4 = inlined_call_operand.vmem [shape: f32[1,128], index: 4, kind: input, shape index: {}]
  %s5 = inlined_call_operand.hbm [shape: f32[64,128], index: 5, kind: output, shape index: {}]
  %s6 = sld [smem:[#allocation0]]
  $region65: #{tpu_custom_call.1} parent=0
    _
  %s8 = ssub.s32 1, %s6
  %s9 = scalar_select 0, %s8, %s6
  $region1: #{tpu_custom_call.1} parent=0
    #allocation2 [shape = 'u8[512]{0}', space=smem, size = 0x200, scoped, tag = 'input window, operand 0, single buffered']
    #allocation3 [shape = 's32[2]{0}', space=sflag, size = 0x8, scoped, tag = 'scoped memory for tpu_custom_call.1']
    #allocation4 [shape = 's32[2]{0}', space=sflag, size = 0x8, scoped, tag = 'scoped memory for tpu_custom_call.1']
    #allocation5 [shape = 's32[2]{0}', space=sflag, size = 0x8, scoped, tag = 'scoped memory for tpu_custom_call.1']
    #allocation6 [shape = 'u8[65536]{0}', space=vmem, size = 0x10000, scoped, tag = 'input window, operand 2, single buffered']
    #allocation7 [shape = 'u8[8192]{0}', space=vmem, size = 0x2000, scoped, tag = 'output window, operand 0']
    %10 = vsyncpa [#allocation5], 0
    %11 = vsyncpa [#allocation3], 0
    %12 = vsyncpa [#allocation4], 0
    %s13 = scalar_lea.sflag [#allocation4], 1
    %14 = vsyncpa %s13, 0
    loop: start=0, step=1, limit=10
    $region2: #{tpu_custom_call.1} parent=1 // loop_pre_header
      _
    $region3: #{tpu_custom_call.1} parent=1 // loop_header
      %s16 = sphi 0, %s20
      %p17 = scmp.ge.s32.totalorder %s16, 10
      %s23 = sphi 0, %s35
      %s24 = sphi 0, %s31
      %s25 = sphi 0, %s23
      %s26 = sphi 0, %s24
      %s27 = sphi 0, %s25
      %s28 = sphi 0, %s26
      %s36 = sphi 0, %s36
      %s38 = sphi 0, %s36
      %s39 = sphi 0, %s38
      %s53 = sphi 0, %s39
      %s59 = sphi 0, %s61
      %s62 = sphi 0, %s59
      %s63 = sphi 0, %s62
      %s79 = sphi 0, %s63
      %s85 = sphi 0, %s87
      %s88 = sphi 0, %s85
      %s89 = sphi 0, %s88
      %s105 = sphi 0, %s89
      %s111 = sphi 0, %s113
      %s114 = sphi 0, %s111
      %s115 = sphi 0, %s114
      %s131 = sphi 0, %s115
      %s137 = sphi 0, %s139
      %s140 = sphi 0, %s137
      %s141 = sphi 0, %s140
      %s157 = sphi 0, %s141
      %s163 = sphi 0, %s165
      %s166 = sphi 0, %s163
      %s167 = sphi 0, %s166
      %s183 = sphi 0, %s167
    $region4: #{tpu_custom_call.1} parent=1 // loop_header_branch
      %19 = sbr.rel (%p17) target = $region8
    $region5: #{tpu_custom_call.1} parent=1 // loop_body
      %s21 = ssub.s32 %s16, 1
      %s22 = ssub.s32 %s16, 2
      %s29 = sadd.s32 1, %s24
      %p30 = scmp.ge.s32.totalorder %s29, 1
      %s31 = scalar_select %p30, 0, %s29
      %s32 = sadd.s32 1, %s23
      %s33 = scalar_select %p30, %s32, %s23
      %p34 = scmp.ge.s32.totalorder %s33, 8
      %s35 = scalar_select %p34, 0, %s33
      %s37 = sadd.s32 %s36, 1
      %p40 = scmp.eq.s32.totalorder %s16, 7
      %p41 = scmp.ne.s32.totalorder %s36, %s38
      %p42 = scmp.eq.s32.totalorder %s16, 0
      %p43 = por %p41, %p42
      %p44 = scmp.ne.s32.totalorder %s36, %s38
      %p45 = scmp.eq.s32.totalorder %s21, 7
      %p46 = por %p44, %p45
      %p47 = scmp.ne.s32.totalorder %s38, %s39
      %p48 = scmp.eq.s32.totalorder %s21, 0
      %p49 = por %p47, %p48
      %p50 = scmp.ne.s32.totalorder %s38, %s39
      %p51 = scmp.eq.s32.totalorder %s22, 7
      %p52 = por %p50, %p51
      %p54 = scmp.ne.s32.totalorder %s39, %s53
      %p55 = scmp.eq.s32.totalorder %s22, 0
      %p56 = por %p54, %p55
      %s57 = ssub.s32 %s23, %s35
      %p58 = scmp.eq.s32.totalorder %s57, 0
      %s60 = sadd.s32 %s59, 1
      %s61 = scalar_select %p58, %s59, %s60
      %p64 = pneg %p58
      %p65 = scmp.eq.s32.totalorder %s16, 7
      %p66 = por %p64, %p65
      %p67 = scmp.ne.s32.totalorder %s59, %s62
      %p68 = scmp.eq.s32.totalorder %s16, 0
      %p69 = por %p67, %p68
      %p70 = scmp.ne.s32.totalorder %s59, %s62
      %p71 = scmp.eq.s32.totalorder %s21, 7
      %p72 = por %p70, %p71
      %p73 = scmp.ne.s32.totalorder %s62, %s63
      %p74 = scmp.eq.s32.totalorder %s21, 0
      %p75 = por %p73, %p74
      %p76 = scmp.ne.s32.totalorder %s62, %s63
      %p77 = scmp.eq.s32.totalorder %s22, 7
      %p78 = por %p76, %p77
      %p80 = scmp.ne.s32.totalorder %s63, %s79
      %p81 = scmp.eq.s32.totalorder %s22, 0
      %p82 = por %p80, %p81
      %s83 = ssub.s32 %s24, %s31
      %p84 = scmp.eq.s32.totalorder %s83, 0
      %s86 = sadd.s32 %s85, 1
      %s87 = scalar_select %p84, %s85, %s86
      %p90 = pneg %p84
      %p91 = scmp.eq.s32.totalorder %s16, 7
      %p92 = por %p90, %p91
      %p93 = scmp.ne.s32.totalorder %s85, %s88
      %p94 = scmp.eq.s32.totalorder %s16, 0
      %p95 = por %p93, %p94
      %p96 = scmp.ne.s32.totalorder %s85, %s88
      %p97 = scmp.eq.s32.totalorder %s21, 7
      %p98 = por %p96, %p97
      %p99 = scmp.ne.s32.totalorder %s88, %s89
      %p100 = scmp.eq.s32.totalorder %s21, 0
      %p101 = por %p99, %p100
      %p102 = scmp.ne.s32.totalorder %s88, %s89
      %p103 = scmp.eq.s32.totalorder %s22, 7
      %p104 = por %p102, %p103
      %p106 = scmp.ne.s32.totalorder %s89, %s105
      %p107 = scmp.eq.s32.totalorder %s22, 0
      %p108 = por %p106, %p107
      %s109 = ssub.s32 %s23, %s35
      %p110 = scmp.eq.s32.totalorder %s109, 0
      %s112 = sadd.s32 %s111, 1
      %s113 = scalar_select %p110, %s111, %s112
      %p116 = pneg %p110
      %p117 = scmp.eq.s32.totalorder %s16, 7
      %p118 = por %p116, %p117
      %p119 = scmp.ne.s32.totalorder %s111, %s114
      %p120 = scmp.eq.s32.totalorder %s16, 0
      %p121 = por %p119, %p120
      %p122 = scmp.ne.s32.totalorder %s111, %s114
      %p123 = scmp.eq.s32.totalorder %s21, 7
      %p124 = por %p122, %p123
      %p125 = scmp.ne.s32.totalorder %s114, %s115
      %p126 = scmp.eq.s32.totalorder %s21, 0
      %p127 = por %p125, %p126
      %p128 = scmp.ne.s32.totalorder %s114, %s115
      %p129 = scmp.eq.s32.totalorder %s22, 7
      %p130 = por %p128, %p129
      %p132 = scmp.ne.s32.totalorder %s115, %s131
      %p133 = scmp.eq.s32.totalorder %s22, 0
      %p134 = por %p132, %p133
      %s135 = ssub.s32 %s24, %s31
      %p136 = scmp.eq.s32.totalorder %s135, 0
      %s138 = sadd.s32 %s137, 1
      %s139 = scalar_select %p136, %s137, %s138
      %p142 = pneg %p136
      %p143 = scmp.eq.s32.totalorder %s16, 7
      %p144 = por %p142, %p143
      %p145 = scmp.ne.s32.totalorder %s137, %s140
      %p146 = scmp.eq.s32.totalorder %s16, 0
      %p147 = por %p145, %p146
      %p148 = scmp.ne.s32.totalorder %s137, %s140
      %p149 = scmp.eq.s32.totalorder %s21, 7
      %p150 = por %p148, %p149
      %p151 = scmp.ne.s32.totalorder %s140, %s141
      %p152 = scmp.eq.s32.totalorder %s21, 0
      %p153 = por %p151, %p152
      %p154 = scmp.ne.s32.totalorder %s140, %s141
      %p155 = scmp.eq.s32.totalorder %s22, 7
      %p156 = por %p154, %p155
      %p158 = scmp.ne.s32.totalorder %s141, %s157
      %p159 = scmp.eq.s32.totalorder %s22, 0
      %p160 = por %p158, %p159
      %s161 = ssub.s32 %s23, %s35
      %p162 = scmp.eq.s32.totalorder %s161, 0
      %s164 = sadd.s32 %s163, 1
      %s165 = scalar_select %p162, %s163, %s164
      %p168 = pneg %p162
      %p169 = scmp.eq.s32.totalorder %s16, 7
      %p170 = por %p168, %p169
      %p171 = scmp.ne.s32.totalorder %s163, %s166
      %p172 = scmp.eq.s32.totalorder %s16, 0
      %p173 = por %p171, %p172
      %p174 = scmp.ne.s32.totalorder %s163, %s166
      %p175 = scmp.eq.s32.totalorder %s21, 7
      %p176 = por %p174, %p175
      %p177 = scmp.ne.s32.totalorder %s166, %s167
      %p178 = scmp.eq.s32.totalorder %s21, 0
      %p179 = por %p177, %p178
      %p180 = scmp.ne.s32.totalorder %s166, %s167
      %p181 = scmp.eq.s32.totalorder %s22, 7
      %p182 = por %p180, %p181
      %p184 = scmp.ne.s32.totalorder %s167, %s183
      %p185 = scmp.eq.s32.totalorder %s22, 0
      %p186 = por %p184, %p185
      %p187 = scmp.le.s32.totalorder 1, %s16
      %p188 = scmp.lt.s32.totalorder %s16, 9
      %p189 = pnand %p187, %p188
      %p190 = pneg %p189
      // Predicated region
      $region9: #{tpu_custom_call.1} parent=5 // pred_check
        _
      $region10: #{tpu_custom_call.1} parent=5 // pred_check_branch
        %192 = sbr.rel (%p189) target = $region12
      $region11: #{tpu_custom_call.1} parent=5 // pred_region
        %s193 = ssub.s32 %s16, 1
        // Predicated region
        $region13: #{tpu_custom_call.1} parent=11 // pred_check
          %p194 = pneg %p49
        $region14: #{tpu_custom_call.1} parent=11 // pred_check_branch
          %196 = sbr.rel (%p194) target = $region16
        $region15: #{tpu_custom_call.1} parent=11 // pred_region
          %198 = vsyncadd [#allocation5], 0
          %s200 = sshll.u32 %s0, 4
          %s201 = int_to_ptr.vmem [resolvable:$true] %s200
          %203 = dma.vmem_to_smem %s201, 16, [#allocation2], [#allocation5]
        $region16: #{tpu_custom_call.1} parent=11 // pred_fallthru
          _
        // Predicated region
        $region17: #{tpu_custom_call.1} parent=11 // pred_check
          %p204 = pneg %p101
        $region18: #{tpu_custom_call.1} parent=11 // pred_check_branch
          %206 = sbr.rel (%p204) target = $region20
        $region19: #{tpu_custom_call.1} parent=11 // pred_region
          %s207 = smul.u32 16, %s26
          %209 = vsyncadd [#allocation3], 0
          %s210 = smul.addr %s207, 8
          %s211 = scalar_lea.hbm %s2, %s210
          %s212 = sshll.u32 %s211, 4
          %s213 = int_to_ptr.hbm [resolvable:$true] %s212
          %s214 = sshll.u32 [#allocation6], 4
          %s215 = int_to_ptr.vmem [resolvable:$true] %s214
          %220 = dma.hbm_to_vmem [thread:$0]  %s213, 2048, %s215, [#allocation3], 128, 128, 8
        $region20: #{tpu_custom_call.1} parent=11 // pred_fallthru
          _
        // Predicated region
        $region21: #{tpu_custom_call.1} parent=11 // pred_check
          %p221 = pneg %p153
        $region22: #{tpu_custom_call.1} parent=11 // pred_check_branch
          %223 = sbr.rel (%p221) target = $region24
        $region23: #{tpu_custom_call.1} parent=11 // pred_region
          %p224 = scmp.lt.s32.totalorder %s26, 0
          %s225 = scalar_select %p224, %s26, 0
          %s226 = scalar_lea.vmem %s4, %s225
        $region24: #{tpu_custom_call.1} parent=11 // pred_fallthru
          _
      $region12: #{tpu_custom_call.1} parent=5 // pred_fallthru
        _
      %p227 = scmp.lt.s32.totalorder %s16, 8
      // Predicated region
      $region25: #{tpu_custom_call.1} parent=5 // pred_check
        %p228 = pneg %p227
      $region26: #{tpu_custom_call.1} parent=5 // pred_check_branch
        %230 = sbr.rel (%p228) target = $region28
      $region27: #{tpu_custom_call.1} parent=5 // pred_region
        // Predicated region
        $region29: #{tpu_custom_call.1} parent=27 // pred_check
          %p231 = pneg %p69
        $region30: #{tpu_custom_call.1} parent=27 // pred_check_branch
          %233 = sbr.rel (%p231) target = $region32
        $region31: #{tpu_custom_call.1} parent=27 // pred_region
          %s234 = smul.u32 2, %s23
          %p235 = scmp.lt.s32.totalorder %s234, 15
          %s236 = scalar_select %p235, %s234, 15
          %s237 = smul.addr %s236, 8
          %s238 = scalar_lea.vmem %s1, %s237
          %s239 = smul.u32 2, %s23
        $region32: #{tpu_custom_call.1} parent=27 // pred_fallthru
          _
        // Predicated region
        $region33: #{tpu_custom_call.1} parent=27 // pred_check
          %p240 = pneg %p121
        $region34: #{tpu_custom_call.1} parent=27 // pred_check_branch
          %242 = sbr.rel (%p240) target = $region36
        $region35: #{tpu_custom_call.1} parent=27 // pred_region
          %s243 = smul.u32 2, %s23
          %p244 = scmp.lt.s32.totalorder %s243, 15
          %s245 = scalar_select %p244, %s243, 15
          %s246 = smul.addr %s245, 8
          %s247 = scalar_lea.vmem %s3, %s246
          %s248 = smul.u32 2, %s23
        $region36: #{tpu_custom_call.1} parent=27 // pred_fallthru
          _
      $region28: #{tpu_custom_call.1} parent=5 // pred_fallthru
        _
      %p249 = scmp.le.s32.totalorder 1, %s16
      %p250 = scmp.lt.s32.totalorder %s16, 9
      %p251 = pnand %p249, %p250
      %p252 = pneg %p251
      // Predicated region
      $region37: #{tpu_custom_call.1} parent=5 // pred_check
        _
      $region38: #{tpu_custom_call.1} parent=5 // pred_check_branch
        %254 = sbr.rel (%p251) target = $region40
      $region39: #{tpu_custom_call.1} parent=5 // pred_region
        %s255 = ssub.s32 %s16, 1
        // Predicated region
        $region41: #{tpu_custom_call.1} parent=39 // pred_check
          %p256 = pneg %p49
        $region42: #{tpu_custom_call.1} parent=39 // pred_check_branch
          %258 = sbr.rel (%p256) target = $region44
        $region43: #{tpu_custom_call.1} parent=39 // pred_region
          %260 = dma.done [#allocation5], 16
        $region44: #{tpu_custom_call.1} parent=39 // pred_fallthru
          _
        // Predicated region
        $region45: #{tpu_custom_call.1} parent=39 // pred_check
          %p261 = pneg %p101
        $region46: #{tpu_custom_call.1} parent=39 // pred_check_branch
          %263 = sbr.rel (%p261) target = $region48
        $region47: #{tpu_custom_call.1} parent=39 // pred_region
          %265 = dma.done [#allocation3], 2048
        $region48: #{tpu_custom_call.1} parent=39 // pred_fallthru
          _
        %266 = sfence
        %p267 = pneg %p49
        %p268 = pneg %p46
        %s269 = smul.u32 2, %s25
        %p270 = scmp.lt.s32.totalorder %s269, 15
        %s271 = scalar_select %p270, %s269, 15
        %s272 = smul.addr %s271, 8
        %s273 = scalar_lea.vmem %s1, %s272
        %p274 = pneg %p75
        %p275 = pneg %p72
        %p276 = pneg %p101
        %p277 = pneg %p98
        %s278 = smul.u32 2, %s25
        %p279 = scmp.lt.s32.totalorder %s278, 15
        %s280 = scalar_select %p279, %s278, 15
        %s281 = smul.addr %s280, 8
        %s282 = scalar_lea.vmem %s3, %s281
        %p283 = pneg %p127
        %p284 = pneg %p124
        %p285 = scmp.lt.s32.totalorder %s26, 0
        %s286 = scalar_select %p285, %s26, 0
        %s287 = scalar_lea.vmem %s4, %s286
        %p288 = pneg %p153
        %p289 = pneg %p150
        %p290 = pneg %p179
        %p291 = pneg %p176
        %s292 = sand.u32 %s166, 1
        %s293 = scalar_lea.sflag [#allocation4], %s292
        %s294 = sand.u32 %s166, 1
        %s295 = smul.addr %s294, 8
        %s296 = scalar_lea.vmem [#allocation7], %s295
        %s297 = smul.u32 2, %s25
        %p298 = scmp.lt.s32.totalorder %s297, 15
        %s299 = scalar_select %p298, %s297, 15
        %s300 = smul.addr %s299, 8
        %s301 = scalar_lea.vmem %s1, %s300
        %s302 = smul.u32 2, %s25
        %s303 = smul.u32 16, %s26
        %s304 = smul.u32 2, %s25
        %p305 = scmp.lt.s32.totalorder %s304, 15
        %s306 = scalar_select %p305, %s304, 15
        %s307 = smul.addr %s306, 8
        %s308 = scalar_lea.vmem %s3, %s307
        %s309 = smul.u32 2, %s25
        %p310 = scmp.lt.s32.totalorder %s26, 0
        %s311 = scalar_select %p310, %s26, 0
        %s312 = scalar_lea.vmem %s4, %s311
        %p313 = scmp.eq.s32.totalorder %s26, 0
        // Predicated region
        $region49: #{tpu_custom_call.1} parent=39 // pred_check
          %p314 = pneg %p313
        $region50: #{tpu_custom_call.1} parent=39 // pred_check_branch
          %316 = sbr.rel (%p314) target = $region52
        $region51: #{tpu_custom_call.1} parent=39 // pred_region
          %317 = vst [vmem:[%s296] sm:$0xff] 0.0
        $region52: #{tpu_custom_call.1} parent=39 // pred_fallthru
          _
        %v318 = vld [vmem:[%s301] sm:$0xff]
        %v319 = vld [vmem:[%s301 + $0x8] sm:$0xff]
        %v320 = vld [vmem:[#allocation6] sm:$0xff]
        %v321 = vld [vmem:[#allocation6 + $0x8] sm:$0xff]
        %v322 = vld [vmem:[#allocation6 + $0x10] sm:$0xff]
        %v323 = vld [vmem:[#allocation6 + $0x18] sm:$0xff]
        %v324 = vld [vmem:[#allocation6 + $0x20] sm:$0xff]
        %v325 = vld [vmem:[#allocation6 + $0x28] sm:$0xff]
        %v326 = vld [vmem:[#allocation6 + $0x30] sm:$0xff]
        %v327 = vld [vmem:[#allocation6 + $0x38] sm:$0xff]
        %v328 = vld [vmem:[#allocation6 + $0x40] sm:$0xff]
        %v329 = vld [vmem:[#allocation6 + $0x48] sm:$0xff]
        %v330 = vld [vmem:[#allocation6 + $0x50] sm:$0xff]
        %v331 = vld [vmem:[#allocation6 + $0x58] sm:$0xff]
        %v332 = vld [vmem:[#allocation6 + $0x60] sm:$0xff]
        %v333 = vld [vmem:[#allocation6 + $0x68] sm:$0xff]
        %v334 = vld [vmem:[#allocation6 + $0x70] sm:$0xff]
        %v335 = vld [vmem:[#allocation6 + $0x78] sm:$0xff]
        %336 = vmatpush.xpose.msra.mxu0 %v335
        %337 = vmatpush.xpose.msra.mxu0 %v334
        %338 = vmatpush.xpose.msra.mxu0 %v333
        %339 = vmatpush.xpose.msra.mxu0 %v332
        %340 = vmatpush.xpose.msra.mxu0 %v331
        %341 = vmatpush.xpose.msra.mxu0 %v330
        %342 = vmatpush.xpose.msra.mxu0 %v329
        %343 = vmatpush.xpose.msra.mxu0 %v328
        %344 = vmatpush.xpose.msra.mxu0 %v327
        %345 = vmatpush.xpose.msra.mxu0 %v326
        %346 = vmatpush.xpose.msra.mxu0 %v325
        %347 = vmatpush.xpose.msra.mxu0 %v324
        %348 = vmatpush.xpose.msra.mxu0 %v323
        %349 = vmatpush.xpose.msra.mxu0 %v322
        %350 = vmatpush.xpose.msra.mxu0 %v321
        %351 = vmatpush.xpose.msra.mxu0 %v320
        %352 = vmatmul.f32.gmra.mxu0 %v318
        %v353 = vpop.f32.mrf.mxu0
        %v354 = vadd.f32 0.0, %v353
        %355 = vmatmul.f32.gmra.mxu0 %v319
        %v356 = vpop.f32.mrf.mxu0
        %v357 = vadd.f32 0.0, %v356
        %358 = vdwg.mxu0
        %v359 = vld [vmem:[%s308] sm:$0xff]
        %v360 = vld [vmem:[%s308 + $0x8] sm:$0xff]
        %v361 = vld [vmem:[%s312] sm:$0x1]
        %363 = vset.pattern.permute.xlu0 0
        %364 = vperm.xlu0 %363, %v359
        %v365 = vpop.permute.xlu0 %364
        %368 = vset.pattern.permute.xlu0 0
        %369 = vperm.xlu0 %368, %v360
        %v370 = vpop.permute.xlu0 %369
        %v373 = vperm.slane %v361, 0
        %v375 = vadd.f32 %v365, %v373
        %v376 = vadd.f32 %v370, %v373
        %v377 = vmul.f32 %v354, 2.0
        %v378 = vmul.f32 %v357, 2.0
        %v379 = vsub.f32 %v375, %v377
        %v380 = vsub.f32 %v376, %v378
        %v381 = vmax.f32 %v379, 0.0
        %v382 = vmax.f32 %v380, 0.0
        %s383 = sld [smem:[#allocation2 + $0x4]]
        %v384 = vstv %s383
        %v385 = vmul.f32 %v381, %v384
        %v386 = vmul.f32 %v382, %v384
        %v387 = vmul.f32 %v385, 1.442695
        %v388 = vpow.pop %v387
        %v389 = vmul.f32 %v386, 1.442695
        %v390 = vpow.pop %v389
        %v391 = vmul.f32 %v388, %v388
        %v392 = vmul.f32 %v390, %v390
        %v393 = vadd.f32 %v388, %v391
        %v394 = vadd.f32 %v390, %v392
        %v395 = vmul.f32 %v391, %v391
        %v396 = vmul.f32 %v392, %v392
        %v397 = vadd.f32 %v393, %v395
        %v398 = vadd.f32 %v394, %v396
        %v399 = vmul.f32 %v395, %v395
        %v400 = vmul.f32 %v396, %v396
        %v401 = vadd.f32 %v397, %v399
        %v402 = vadd.f32 %v398, %v400
        %v403 = vmul.f32 %v399, %v399
        %v404 = vmul.f32 %v400, %v400
        %v405 = vadd.f32 %v401, %v403
        %v406 = vadd.f32 %v402, %v404
        %v407 = vlaneseq
        %v408 = vshrl.u32 %v407, 7
        %v409 = vadd.s32 %v408, 8
        %s410 = smul.u32 %s25, 16
        %v411 = vstv %s410
        %v412 = vadd.s32 %v408, %v411
        %v413 = vadd.s32 %v409, %v411
        %v414 = vlaneseq
        %v415 = vand.u32 %v414, 127
        %s416 = smul.u32 %s26, 128
        %v417 = vstv %s416
        %v418 = vadd.s32 %v415, %v417
        %vm419 = vcmp.lt.s32.totalorder %v412, 8
        %vm420 = vcmp.lt.s32.totalorder %v413, 8
        %vm421 = vcmp.lt.s32.totalorder %v418, 8
        %vm422 = vmxor %vm419, %vm421
        %vm423 = vmxor %vm420, %vm421
        %vm424 = vmxor %vm422, 1
        %vm425 = vmxor %vm423, 1
        %v426 = vsel %vm424, 1.0, -1.0
        %v427 = vsel %vm425, 1.0, -1.0
        %v428 = vmul.f32 %v426, %v405
        %v429 = vmul.f32 %v427, %v406
        %v430 = vadd.f32 %v428, %v429
        %v431 = vld [vmem:[%s296] sm:$0xff]
        %v432 = vadd.f32 %v431, %v430
        %433 = vst [vmem:[%s296] sm:$0xff] %v432
        %s434 = sand.u32 %s166, 1
        %s435 = scalar_lea.sflag [#allocation4], %s434
        %s436 = sand.u32 %s166, 1
        %s437 = smul.addr %s436, 8
        %s438 = scalar_lea.vmem [#allocation7], %s437
        // Predicated region
        $region53: #{tpu_custom_call.1} parent=39 // pred_check
          %p439 = pneg %p176
        $region54: #{tpu_custom_call.1} parent=39 // pred_check_branch
          %441 = sbr.rel (%p439) target = $region56
        $region55: #{tpu_custom_call.1} parent=39 // pred_region
          %443 = vsyncadd %s435, 0
          %s444 = smul.addr %s25, 8
          %s445 = scalar_lea.hbm %s5, %s444
          %s447 = sshll.u32 %s438, 4
          %s448 = int_to_ptr.vmem [resolvable:$true] %s447
          %s449 = sshll.u32 %s445, 4
          %s450 = int_to_ptr.hbm [resolvable:$true] %s449
          %452 = dma.vmem_to_hbm [thread:$0]  %s448, 128, %s450, %s435
        $region56: #{tpu_custom_call.1} parent=39 // pred_fallthru
          _
      $region40: #{tpu_custom_call.1} parent=5 // pred_fallthru
        _
      %p453 = scmp.le.s32.totalorder 2, %s16
      // Predicated region
      $region57: #{tpu_custom_call.1} parent=5 // pred_check
        %p454 = pneg %p453
      $region58: #{tpu_custom_call.1} parent=5 // pred_check_branch
        %456 = sbr.rel (%p454) target = $region60
      $region59: #{tpu_custom_call.1} parent=5 // pred_region
        %s457 = ssub.s32 %s16, 2
        // Predicated region
        $region61: #{tpu_custom_call.1} parent=59 // pred_check
          %p458 = pneg %p182
        $region62: #{tpu_custom_call.1} parent=59 // pred_check_branch
          %460 = sbr.rel (%p458) target = $region64
        $region63: #{tpu_custom_call.1} parent=59 // pred_region
          %s461 = sand.u32 %s167, 1
          %s462 = scalar_lea.sflag [#allocation4], %s461
          %s463 = sand.u32 %s167, 1
          %s464 = smul.addr %s463, 8
          %s465 = scalar_lea.vmem [#allocation7], %s464
          %467 = dma.done %s462, 128
        $region64: #{tpu_custom_call.1} parent=59 // pred_fallthru
          _
      $region60: #{tpu_custom_call.1} parent=5 // pred_fallthru
        _
    $region6: #{tpu_custom_call.1} parent=1 // loop_footer
      %s20 = sadd.s32 1, %s16
    $region7: #{tpu_custom_call.1} parent=1 // loop_footer_branch
      %15 = sbr.rel target = $region3
    $region8: #{tpu_custom_call.1} parent=1 // loop_exit
      _
    %468 = vsyncpa [#allocation3], 1
    %s469 = scalar_lea.sflag [#allocation3], 1
    %470 = vsyncpa %s469, 1
    %471 = vsyncpa [#allocation4], 1
    %s472 = scalar_lea.sflag [#allocation4], 1
    %473 = vsyncpa %s472, 1
    %474 = vsyncpa [#allocation5], 1
    %s475 = scalar_lea.sflag [#allocation5], 1
    %476 = vsyncpa %s475, 1

</llo_original>
